<compile_context>
chip_gen: v5e
topology: v5e:2x2
jax: 0.10.0
libtpu: 0.0.40
codegen_flags: <defaults>
</compile_context>

<pallas_src>
import jax
import jax.numpy as jnp
from jax.experimental import pallas as pl
from jax.experimental.pallas import tpu as pltpu

_LANES = 128
_MAX_BLOCK_ROWS = 1024  # (1024, 128) f32 = 512 KiB per buffer; tiny vs VMEM on all chips


def _sum_sq_kernel(x_ref, acc_ref):
    """Tiled global sum(x*x).

    acc_ref is a (1, 1) f32 output block revisited across the (sequential)
    grid axis -> accumulator pattern (init at step 0, accumulate each step).
    """
    @pl.when(pl.program_id(0) == 0)
    def _():
        acc_ref[...] = jnp.zeros_like(acc_ref)

    x = x_ref[...].astype(jnp.float32)
    acc_ref[...] += jnp.sum(x * x)


def _awgn_noise_kernel(std_ref, x_ref, n_ref, y_ref):
    """Elementwise y = x + noise_std * n.

    std_ref: SMEM (1,) f32 scalar (noise standard deviation, precomputed).
    x_ref / n_ref / y_ref: VMEM (block_rows, 128) f32 tiles.
    """
    std = std_ref[0]
    y_ref[...] = (x_ref[...] + std * n_ref[...]).astype(y_ref.dtype)


def _pick_tiling(total):
    """Return (rows_padded, block_rows) for a lane-dense (rows, 128) f32 slab."""
    rows = (total + _LANES - 1) // _LANES
    if rows <= _MAX_BLOCK_ROWS:
        rows_p = ((rows + 7) // 8) * 8          # multiple of sublane count
        return rows_p, rows_p                    # single full-array block
    rows_p = ((rows + _MAX_BLOCK_ROWS - 1) // _MAX_BLOCK_ROWS) * _MAX_BLOCK_ROWS
    return rows_p, _MAX_BLOCK_ROWS


def awgn_channel(x_nchw, snr_db, seed=0):
    """Forward pass of the AWGN channel.

    Args:
      x_nchw: (B, C, H, W) float32 signal (PyTorch NCHW convention).
      snr_db: scalar SNR in dB.
      seed:   int PRNG seed (deterministic noise).

    Returns:
      (B, C, H, W) float32 received signal y = x + noise.
    """
    x_nchw = jnp.asarray(x_nchw, jnp.float32)
    orig_shape = x_nchw.shape
    total = int(x_nchw.size)

    rows_p, block_rows = _pick_tiling(total)
    padded = rows_p * _LANES

    x_flat = x_nchw.reshape(-1)
    if padded != total:
        x_flat = jnp.pad(x_flat, (0, padded - total))   # zero-pad (does not bias sum(x*x))
    x2d = x_flat.reshape(rows_p, _LANES)

    grid = (rows_p // block_rows,)
    tile = (block_rows, _LANES)

    # ---- Pass 1: global signal power ------------------------------------
    sum_sq = pl.pallas_call(
        _sum_sq_kernel,
        out_shape=jax.ShapeDtypeStruct((1, 1), jnp.float32),
        grid=grid,
        in_specs=[pl.BlockSpec(tile, lambda i: (i, 0))],
        out_specs=pl.BlockSpec((1, 1), lambda i: (0, 0)),
        compiler_params=pltpu.CompilerParams(
            dimension_semantics=("arbitrary",)),
    )(x2d)[0, 0]

    sig_power = sum_sq / jnp.float32(total)              # mean over *real* elements
    snr_lin = jnp.power(jnp.float32(10.0),
                        jnp.asarray(snr_db, jnp.float32) / jnp.float32(10.0))
    noise_std = jnp.sqrt(sig_power / snr_lin)
    std_arr = noise_std.reshape(1)

    # Standard-normal noise (deterministic in `seed`).
    noise2d = jax.random.normal(jax.random.PRNGKey(seed), (rows_p, _LANES),
                                dtype=jnp.float32)

    # ---- Pass 2: tiled, pipelined elementwise noise injection -----------
    y2d = pl.pallas_call(
        _awgn_noise_kernel,
        out_shape=jax.ShapeDtypeStruct((rows_p, _LANES), jnp.float32),
        grid=grid,
        in_specs=[
            pl.BlockSpec(memory_space=pltpu.MemorySpace.SMEM),  # noise_std scalar
            pl.BlockSpec(tile, lambda i: (i, 0)),               # x
            pl.BlockSpec(tile, lambda i: (i, 0)),               # noise
        ],
        out_specs=pl.BlockSpec(tile, lambda i: (i, 0)),
        input_output_aliases={1: 0},                            # y reuses x's HBM buffer
        compiler_params=pltpu.CompilerParams(
            dimension_semantics=("parallel",)),                 # 2 TCs on v7x; no-op v5e/v6e
        cost_estimate=pl.CostEstimate(
            flops=2 * padded,
            transcendentals=0,
            bytes_accessed=3 * padded * 4 + 4),
    )(std_arr, x2d, noise2d)

    y_flat = y2d.reshape(-1)
    if padded != total:
        y_flat = y_flat[:total]
    return y_flat.reshape(orig_shape)


if __name__ == "__main__":
    key = jax.random.PRNGKey(0)
    # Small shape consistent with an image/feature-map signal: NCHW = (2, 4, 16, 16)
    x = jax.random.normal(key, (2, 4, 16, 16), dtype=jnp.float32)
    snr_db = 10.0

    y = awgn_channel(x, snr_db, seed=0)
    y = jax.block_until_ready(y)

    assert y.shape == x.shape and y.dtype == jnp.float32
    assert bool(jnp.all(jnp.isfinite(y)))

    # Sanity: realized noise power should be ~ sig_power / 10**(snr_db/10).
    noise = y - x
    sig_p = float(jnp.mean(x * x))
    noise_p = float(jnp.mean(noise * noise))
    expected = sig_p / (10.0 ** (snr_db / 10.0))
    assert 0.5 * expected < noise_p < 2.0 * expected, (noise_p, expected)

    print("KERNEL_OK")
</pallas_src>

<mosaic_0001>
module attributes {stable_mosaic.version = 11 : i64} {
  func.func @_sum_sq_kernel(%arg0: i32, %arg1: memref<16x128xf32, #tpu.memory_space<vmem>>, %arg2: memref<1x1xf32, #tpu.memory_space<vmem>>) attributes {dimension_semantics = [#tpu.dimension_semantics<arbitrary>], iteration_bounds = array<i64: 1>, scalar_prefetch = 0 : i64, scratch_operands = 0 : i64, tpu.core_type = #tpu.core_type<tc>, window_params = [{transform_indices = @transform_0, window_bounds = array<i64: 16, 128>}, {pipeline_mode = #tpu.pipeline_mode<synchronous>, transform_indices = @transform_1, window_bounds = array<i64: 1, 1>}]} {
    %c0_i32 = arith.constant 0 : i32
    %0 = arith.cmpi eq, %arg0, %c0_i32 : i32
    %1 = arith.extui %0 : i1 to i32
    %c0_i32_0 = arith.constant 0 : i32
    %2 = arith.cmpi ne, %1, %c0_i32_0 : i32
    scf.if %2 {
      %cst_6 = arith.constant 0.000000e+00 : f32
      %13 = vector.broadcast %cst_6 : f32 to vector<1x1xf32>
      %c0_7 = arith.constant 0 : index
      %c0_8 = arith.constant 0 : index
      %14 = vector.load %arg2[%c0_7, %c0_8] : memref<1x1xf32, #tpu.memory_space<vmem>>, vector<1x1xf32>
      tpu.vector_store %arg2[%c0_7, %c0_8], %13 {strides = array<i32>} : memref<1x1xf32, #tpu.memory_space<vmem>>, vector<1x1xf32>,
    } else {
    }
    %c0 = arith.constant 0 : index
    %c0_1 = arith.constant 0 : index
    %3 = vector.load %arg1[%c0, %c0_1] : memref<16x128xf32, #tpu.memory_space<vmem>>, vector<16x128xf32>
    %c0_2 = arith.constant 0 : index
    %c0_3 = arith.constant 0 : index
    %4 = vector.load %arg2[%c0_2, %c0_3] : memref<1x1xf32, #tpu.memory_space<vmem>>, vector<1x1xf32>
    %5 = arith.mulf %3, %3 : vector<16x128xf32>
    %6 = vector.shape_cast %5 : vector<16x128xf32> to vector<1x16x128xf32>
    %cst = arith.constant dense<0.000000e+00> : vector<1xf32>
    %7 = vector.multi_reduction <add>, %6, %cst [1, 2] : vector<1x16x128xf32> to vector<1xf32>
    %8 = vector.shape_cast %7 : vector<1xf32> to vector<1x1x1xf32>
    %9 = vector.extract %8[0, 0, 0] : f32 from vector<1x1x1xf32>
    %10 = vector.broadcast %9 : f32 to vector<1x1xf32>
    %11 = arith.addf %4, %10 : vector<1x1xf32>
    %c0_4 = arith.constant 0 : index
    %c0_5 = arith.constant 0 : index
    %12 = vector.load %arg2[%c0_4, %c0_5] : memref<1x1xf32, #tpu.memory_space<vmem>>, vector<1x1xf32>
    tpu.vector_store %arg2[%c0_4, %c0_5], %11 {strides = array<i32>} : memref<1x1xf32, #tpu.memory_space<vmem>>, vector<1x1xf32>,
    return
  }
  func.func @transform_0(%arg0: i32) -> (i32, i32) {
    %c0_i32 = arith.constant 0 : i32
    %c0_i32_0 = arith.constant 0 : i32
    return %arg0, %c0_i32 : i32, i32
  }
  func.func @transform_1(%arg0: i32) -> (i32, i32) {
    %c0_i32 = arith.constant 0 : i32
    %c0_i32_0 = arith.constant 0 : i32
    %c0_i32_1 = arith.constant 0 : i32
    return %c0_i32, %c0_i32_0 : i32, i32
  }
}

</mosaic_0001>

<llo_original>
// kernel: tpu_custom_call.1
$region0: #{tpu_custom_call.1}
  #allocation0 [shape = 'u32[]', space=smem, size = 0x4, offset = 0x4, fixed_abs, tag = 'smem constant byte address 0x4 - core index']
  #allocation1 [shape = 'u32[72,128]{1,0:T(1,128)}', space=vmem, size = 0x9000, scoped, tag = 'internal scratch']
  %s0 = inlined_call_operand.hbm [shape: f32[16,128], index: 0, kind: input, shape index: {}]
  %s1 = inlined_call_operand.hbm [shape: f32[1,1], index: 1, kind: output, shape index: {}]
  %s2 = sld [smem:[#allocation0]]
  $region22: #{tpu_custom_call.1} parent=0
    _
  %s4 = ssub.s32 1, %s2
  %s5 = scalar_select 0, %s4, %s2
  $region1: #{tpu_custom_call.1} parent=0
    #allocation2 [shape = 'u8[8192]{0}', space=vmem, size = 0x2000, scoped, tag = 'input window, operand 0, single buffered']
    #allocation3 [shape = 's32[1]{0}', space=sflag, size = 0x4, scoped, tag = 'scoped memory for tpu_custom_call.1']
    #allocation4 [shape = 's32[1]{0}', space=sflag, size = 0x4, scoped, tag = 'scoped memory for tpu_custom_call.1']
    #allocation5 [shape = 'u8[512]{0}', space=vmem, size = 0x400, scoped, tag = 'output window, operand 0, single buffered']
    %6 = vsyncpa [#allocation3], 0
    %7 = vsyncpa [#allocation4], 0
    // Predicated region
    $region2: #{tpu_custom_call.1} parent=1 // pred_check
      _
    $region3: #{tpu_custom_call.1} parent=1 // pred_check_branch
      %9 = sbr.rel (0) target = $region5
    $region4: #{tpu_custom_call.1} parent=1 // pred_region
      %11 = vsyncadd [#allocation3], 0
      %s12 = sshll.u32 %s0, 4
      %s13 = int_to_ptr.hbm [resolvable:$true] %s12
      %s14 = sshll.u32 [#allocation2], 4
      %s15 = int_to_ptr.vmem [resolvable:$true] %s14
      %20 = dma.hbm_to_vmem [thread:$0]  %s13, 256, %s15, [#allocation3], 128, 128, 8
    $region5: #{tpu_custom_call.1} parent=1 // pred_fallthru
      _
    // Predicated region
    $region6: #{tpu_custom_call.1} parent=1 // pred_check
      _
    $region7: #{tpu_custom_call.1} parent=1 // pred_check_branch
      %22 = sbr.rel (0) target = $region9
    $region8: #{tpu_custom_call.1} parent=1 // pred_region
      %24 = dma.done [#allocation3], 256
    $region9: #{tpu_custom_call.1} parent=1 // pred_fallthru
      _
    %p25 = scmp.eq.s32.totalorder 0, 0
    // Predicated region
    $region10: #{tpu_custom_call.1} parent=1 // pred_check
      %p26 = pneg %p25
    $region11: #{tpu_custom_call.1} parent=1 // pred_check_branch
      %28 = sbr.rel (%p26) target = $region13
    $region12: #{tpu_custom_call.1} parent=1 // pred_region
      %vm29 = vcmask 0
      %30 = vst.msk [vmem:[#allocation5] sm:$0x1] %vm29, 0.0
    $region13: #{tpu_custom_call.1} parent=1 // pred_fallthru
      _
    %v31 = vld [vmem:[#allocation2] sm:$0xff]
    %v32 = vld [vmem:[#allocation2 + $0x8] sm:$0xff]
    %v33 = vld [vmem:[#allocation5] sm:$0x1]
    %v34 = vmul.f32 %v31, %v31
    %v35 = vmul.f32 %v32, %v32
    %v36 = vadd.f32 %v34, %v35
    %37 = vadd.xlane.f32.xlu0 %v36
    %v38 = vpop.xlane.xlu0 %37
    %v39 = vrot.slane %v38, 4
    %v40 = vadd.f32 %v38, %v39
    %v41 = vrot.slane %v40, 2
    %v42 = vadd.f32 %v40, %v41
    %v43 = vrot.slane %v42, 1
    %v44 = vadd.f32 %v42, %v43
    %s45 = vtos %v44
    %v46 = vstv %s45
    %v47 = vadd.f32 %v33, %v46
    %vm48 = vcmask 0
    %49 = vst.msk [vmem:[#allocation5] sm:$0x1] %vm48, %v47
    // Predicated region
    $region14: #{tpu_custom_call.1} parent=1 // pred_check
      _
    $region15: #{tpu_custom_call.1} parent=1 // pred_check_branch
      %51 = sbr.rel (0) target = $region17
    $region16: #{tpu_custom_call.1} parent=1 // pred_region
      %53 = vsyncadd [#allocation4], 0
      %s55 = sshll.u32 [#allocation5], 4
      %s56 = int_to_ptr.vmem [resolvable:$true] %s55
      %s57 = sshll.u32 %s1, 4
      %s58 = int_to_ptr.hbm [resolvable:$true] %s57
      %60 = dma.vmem_to_hbm [thread:$0]  %s56, 16, %s58, [#allocation4]
    $region17: #{tpu_custom_call.1} parent=1 // pred_fallthru
      _
    // Predicated region
    $region18: #{tpu_custom_call.1} parent=1 // pred_check
      _
    $region19: #{tpu_custom_call.1} parent=1 // pred_check_branch
      %62 = sbr.rel (0) target = $region21
    $region20: #{tpu_custom_call.1} parent=1 // pred_region
      %64 = dma.done [#allocation4], 16
    $region21: #{tpu_custom_call.1} parent=1 // pred_fallthru
      _
    %65 = vsyncpa [#allocation3], 1
    %66 = vsyncpa [#allocation4], 1

</llo_original>
